<compile_context>
chip_gen: v7x
topology: tpu7x:2x2x1
jax: 0.10.0
libtpu: 0.0.40
codegen_flags: <defaults>
</compile_context>

<pallas_src>
import functools

import jax
import jax.numpy as jnp
from jax import lax
from jax.experimental import pallas as pl
from jax.experimental.pallas import tpu as pltpu


_NEG_INF = -1e30  # large-negative additive mask bias


# ---------------- fused per-batch multi-head attention + output projection ----------------
def mhsa_kernel(x_ref, w_qkv_ref, w_proj_ref, b_proj_ref, mask_ref, o_ref,
                qkv_scr, head_scr, *, num_heads, head_size):
    # x_ref:      (1, T, E)  input dtype (f32)
    # w_qkv_ref:  (E, 3E)    bf16; columns = [Wq | Wk | Wv], head-major on the out axis
    # w_proj_ref: (E, E)     bf16; (in, out) layout
    # b_proj_ref: (1, E)     f32
    # mask_ref:   (T, T)     f32 additive causal bias (0 / -1e30)
    # o_ref:      (1, T, E)
    # qkv_scr:    (T, 3E)    bf16 VMEM scratch
    # head_scr:   (T, E)     bf16 VMEM scratch (concatenated per-head contexts)
    NH, H = num_heads, head_size
    T = x_ref.shape[1]
    E = x_ref.shape[2]
    cdt = jnp.bfloat16

    # Fused QKV projection: one lane-dense (T,E)x(E,3E) MXU matmul (f32 accumulation),
    # staged to bf16 VMEM scratch so the (T,3E) result never lives across the head loop.
    qkv_scr[...] = jnp.dot(x_ref[0].astype(cdt), w_qkv_ref[...],
                           preferred_element_type=jnp.float32).astype(cdt)

    scale = jnp.float32(H) ** -0.5
    mask = mask_ref[...]                                       # (T, T) f32

    # NH is small & static.  All large operands below are per-iteration ref loads
    # (static, aligned), so live ranges stay bounded despite the Python unroll.
    # TODO(synk): for NH >= 8 move heads onto a trailing "arbitrary" grid axis.
    for h in range(NH):
        q_h = qkv_scr[:, h * H:(h + 1) * H]                    # (T, H) bf16
        k_h = qkv_scr[:, E + h * H:E + (h + 1) * H]            # (T, H) bf16
        v_h = qkv_scr[:, 2 * E + h * H:2 * E + (h + 1) * H]    # (T, H) bf16

        # scores: contract on the head dim of both operands (no explicit transpose)
        s = lax.dot_general(q_h, k_h, (((1,), (1,)), ((), ())),
                            preferred_element_type=jnp.float32)        # (T, T) f32
        s = s * scale + mask

        # softmax in f32 (EUP exp; approx reciprocal rides the EUP slot for ~free)
        s = s - jnp.max(s, axis=-1, keepdims=True)
        p = jnp.exp(s)
        p = p * pl.reciprocal(jnp.sum(p, axis=-1, keepdims=True), approx=True)

        # per-head context, parked in the concat scratch at lane offset h*H
        head_scr[:, h * H:(h + 1) * H] = jnp.dot(
            p.astype(cdt), v_h, preferred_element_type=jnp.float32).astype(cdt)

    # Single output projection with a full E-wide contraction (full MXU occupancy),
    # writing the lane-dense (1, T, E) output block directly.
    out = jnp.dot(head_scr[...], w_proj_ref[...],
                  preferred_element_type=jnp.float32)                   # (T, E) f32
    out = out + b_proj_ref[...].astype(jnp.float32)
    o_ref[...] = out[None].astype(o_ref.dtype)


# ---------------- one-time parameter packing (hoisted out of the per-call path) ------------
def pack_mhsa_params(wq, wk, wv, proj_w, proj_b, seq_len):
    """wq/wk/wv/proj_w are (E, E), (in, out) layout, heads concatenated head-major on the
    out axis (i.e. PyTorch per-head Linear weight, transposed and concatenated)."""
    w_qkv = jnp.concatenate([wq, wk, wv], axis=1).astype(jnp.bfloat16)   # (E, 3E) bf16
    w_proj = proj_w.astype(jnp.bfloat16)                                 # (E, E)  bf16
    b_proj = proj_b.reshape(1, -1).astype(jnp.float32)                   # (1, E)  f32
    row = lax.broadcasted_iota(jnp.int32, (seq_len, seq_len), 0)
    col = lax.broadcasted_iota(jnp.int32, (seq_len, seq_len), 1)
    mask = jnp.where(col <= row, 0.0, _NEG_INF).astype(jnp.float32)      # (T, T)  f32
    return w_qkv, w_proj, b_proj, mask


# ---------------- wrapper ----------------
def multi_head_self_attention(x, w_qkv, w_proj, b_proj, mask, *, num_heads):
    B, T, E = x.shape
    assert E % num_heads == 0
    H = E // num_heads
    assert w_qkv.shape == (E, 3 * E) and w_proj.shape == (E, E)
    assert mask.shape == (T, T)

    kernel = functools.partial(mhsa_kernel, num_heads=num_heads, head_size=H)

    # VMEM residency estimate: x/out double-buffered, single-buffered bf16 weights +
    # mask, bf16 scratch, plus headroom for the live (T,T) score/prob tiles.
    need = (
        2 * 2 * T * E * x.dtype.itemsize      # x + out blocks, double-buffered
        + 3 * E * E * 2                       # w_qkv bf16 (single-buffered)
        + E * E * 2                           # w_proj bf16
        + T * T * 4                           # causal mask bias f32
        + E * 4                               # proj bias f32
        + 3 * T * E * 2                       # qkv scratch bf16
        + T * E * 2                           # head-out scratch bf16
        + 3 * T * T * 4                       # score/prob working-set headroom
    )
    vmem_limit = min(64 * 1024 * 1024, max(32 * 1024 * 1024, int(need * 3 // 2)))

    resident = dict(pipeline_mode=pl.Buffered(1))  # grid-invariant -> single buffer

    return pl.pallas_call(
        kernel,
        out_shape=jax.ShapeDtypeStruct((B, T, E), x.dtype),
        grid_spec=pltpu.PrefetchScalarGridSpec(
            num_scalar_prefetch=0,
            grid=(B,),
            in_specs=[
                pl.BlockSpec((1, T, E), lambda b: (b, 0, 0)),               # x
                pl.BlockSpec((E, 3 * E), lambda b: (0, 0), **resident),     # fused QKV weight
                pl.BlockSpec((E, E), lambda b: (0, 0), **resident),         # proj weight
                pl.BlockSpec((1, E), lambda b: (0, 0), **resident),         # proj bias
                pl.BlockSpec((T, T), lambda b: (0, 0), **resident),         # causal mask bias
            ],
            out_specs=pl.BlockSpec((1, T, E), lambda b: (b, 0, 0)),         # lane-dense out
            scratch_shapes=[
                pltpu.VMEM((T, 3 * E), jnp.bfloat16),   # qkv scratch
                pltpu.VMEM((T, E), jnp.bfloat16),       # concatenated head outputs
            ],
        ),
        compiler_params=pltpu.CompilerParams(
            dimension_semantics=("parallel",),           # batch shards across v7x TCs
            vmem_limit_bytes=vmem_limit),
    )(x, w_qkv, w_proj, b_proj, mask)


# ---------------- pure-JAX reference (f32) for the correctness check ----------------
def reference(x, wq, wk, wv, proj_w, proj_b, num_heads):
    B, T, E = x.shape
    H = E // num_heads
    mask = jnp.tril(jnp.ones((T, T), dtype=bool))
    head_outs = []
    for h in range(num_heads):
        q = x @ wq[:, h * H:(h + 1) * H]
        k = x @ wk[:, h * H:(h + 1) * H]
        v = x @ wv[:, h * H:(h + 1) * H]
        s = jnp.einsum("btk,bsk->bts", q, k) * (H ** -0.5)
        s = jnp.where(mask, s, -jnp.inf)
        p = jax.nn.softmax(s, axis=-1)
        head_outs.append(jnp.einsum("bts,bsk->btk", p, v))
    cat = jnp.concatenate(head_outs, axis=-1)
    return cat @ proj_w + proj_b


if __name__ == "__main__":
    # small shapes consistent with the module: batch=2, seq=16, embed=32, heads=4
    B, T, E, NH = 2, 16, 32, 4
    H = E // NH

    key = jax.random.PRNGKey(0)
    kx, kq, kk, kv, kw, kb = jax.random.split(key, 6)

    x = jax.random.normal(kx, (B, T, E), dtype=jnp.float32)
    # per-head projection weights packed as (E, NH*H) = (E, E), (in, out) layout
    wq = 0.05 * jax.random.normal(kq, (E, E), dtype=jnp.float32)
    wk = 0.05 * jax.random.normal(kk, (E, E), dtype=jnp.float32)
    wv = 0.05 * jax.random.normal(kv, (E, E), dtype=jnp.float32)
    # output projection, pre-transposed to (in=E, out=E), bias as (1, E)
    proj_w = 0.05 * jax.random.normal(kw, (E, E), dtype=jnp.float32)
    proj_b = 0.05 * jax.random.normal(kb, (1, E), dtype=jnp.float32)

    # one-time packing: bf16 fused weights + additive causal mask
    w_qkv, w_proj_bf16, b_proj, mask = pack_mhsa_params(wq, wk, wv, proj_w, proj_b, T)

    out = multi_head_self_attention(x, w_qkv, w_proj_bf16, b_proj, mask, num_heads=NH)
    out = jax.block_until_ready(out)

    ref = reference(x, wq, wk, wv, proj_w, proj_b, NH)
    assert out.shape == (B, T, E)
    # bf16 MXU inputs + approx reciprocal -> loose-ish but safe tolerance
    assert jnp.allclose(out, ref, atol=2e-2, rtol=2e-2), (
        "mismatch vs reference, max abs diff = %g" % float(jnp.max(jnp.abs(out - ref))))

    print("KERNEL_OK")
</pallas_src>

<mosaic_0001>
module attributes {stable_mosaic.version = 11 : i64} {
  func.func @mhsa_kernel(%arg0: i32, %arg1: memref<1x16x32xf32, #tpu.memory_space<vmem>>, %arg2: memref<32x96xbf16, #tpu.memory_space<vmem>>, %arg3: memref<32x32xbf16, #tpu.memory_space<vmem>>, %arg4: memref<1x32xf32, #tpu.memory_space<vmem>>, %arg5: memref<16x16xf32, #tpu.memory_space<vmem>>, %arg6: memref<1x16x32xf32, #tpu.memory_space<vmem>>, %arg7: memref<16x96xbf16, #tpu.memory_space<vmem>>, %arg8: memref<16x32xbf16, #tpu.memory_space<vmem>>) attributes {dimension_semantics = [#tpu.dimension_semantics<parallel>], iteration_bounds = array<i64: 2>, scalar_prefetch = 0 : i64, scratch_operands = 2 : i64, tpu.core_type = #tpu.core_type<tc>, window_params = [{transform_indices = @transform_0, window_bounds = array<i64: 1, 16, 32>}, {pipeline_mode = #tpu.pipeline_mode<synchronous>, transform_indices = @transform_1, window_bounds = array<i64: 32, 96>}, {pipeline_mode = #tpu.pipeline_mode<synchronous>, transform_indices = @transform_2, window_bounds = array<i64: 32, 32>}, {pipeline_mode = #tpu.pipeline_mode<synchronous>, transform_indices = @transform_3, window_bounds = array<i64: 1, 32>}, {pipeline_mode = #tpu.pipeline_mode<synchronous>, transform_indices = @transform_4, window_bounds = array<i64: 16, 16>}, {transform_indices = @transform_5, window_bounds = array<i64: 1, 16, 32>}]} {
    %c0 = arith.constant 0 : index
    %c0_0 = arith.constant 0 : index
    %c0_1 = arith.constant 0 : index
    %0 = vector.load %arg1[%c0, %c0_0, %c0_1] : memref<1x16x32xf32, #tpu.memory_space<vmem>>, vector<1x16x32xf32>
    %1 = vector.shape_cast %0 : vector<1x16x32xf32> to vector<16x32xf32>
    %2 = arith.truncf %1 : vector<16x32xf32> to vector<16x32xbf16>
    %c0_2 = arith.constant 0 : index
    %c0_3 = arith.constant 0 : index
    %3 = vector.load %arg2[%c0_2, %c0_3] : memref<32x96xbf16, #tpu.memory_space<vmem>>, vector<32x96xbf16>
    %cst = arith.constant dense<0.000000e+00> : vector<16x96xf32>
    %4 = tpu.matmul %2, %3, %cst {dimension_numbers = #tpu.dot_dimension_numbers<[1], [0], [0], [1], [0, 0, 1, 1], [], []>} : vector<16x32xbf16>, vector<32x96xbf16>, vector<16x96xf32> -> vector<16x96xf32>
    %5 = arith.truncf %4 : vector<16x96xf32> to vector<16x96xbf16>
    %c0_4 = arith.constant 0 : index
    %c0_5 = arith.constant 0 : index
    %6 = vector.load %arg7[%c0_4, %c0_5] : memref<16x96xbf16, #tpu.memory_space<vmem>>, vector<16x96xbf16>
    tpu.vector_store %arg7[%c0_4, %c0_5], %5 {strides = array<i32>} : memref<16x96xbf16, #tpu.memory_space<vmem>>, vector<16x96xbf16>,
    %cst_6 = arith.constant 8.000000e+00 : f32
    %cst_7 = arith.constant -5.000000e-01 : f32
    %7 = math.powf %cst_6, %cst_7 : f32
    %c0_8 = arith.constant 0 : index
    %c0_9 = arith.constant 0 : index
    %8 = vector.load %arg5[%c0_8, %c0_9] : memref<16x16xf32, #tpu.memory_space<vmem>>, vector<16x16xf32>
    %c0_10 = arith.constant 0 : index
    %c0_11 = arith.constant 0 : index
    %9 = vector.load %arg7[%c0_10, %c0_11] : memref<16x96xbf16, #tpu.memory_space<vmem>>, vector<16x8xbf16>
    %c0_12 = arith.constant 0 : index
    %c32 = arith.constant 32 : index
    %10 = vector.load %arg7[%c0_12, %c32] : memref<16x96xbf16, #tpu.memory_space<vmem>>, vector<16x8xbf16>
    %c0_13 = arith.constant 0 : index
    %c64 = arith.constant 64 : index
    %11 = vector.load %arg7[%c0_13, %c64] : memref<16x96xbf16, #tpu.memory_space<vmem>>, vector<16x8xbf16>
    %cst_14 = arith.constant dense<0.000000e+00> : vector<16x16xf32>
    %12 = tpu.matmul %9, %10, %cst_14 {dimension_numbers = #tpu.dot_dimension_numbers<[1], [1], [0], [0], [0, 0, 1, 0], [], []>} : vector<16x8xbf16>, vector<16x8xbf16>, vector<16x16xf32> -> vector<16x16xf32>
    %13 = vector.broadcast %7 : f32 to vector<16x16xf32>
    %14 = arith.mulf %12, %13 : vector<16x16xf32>
    %15 = arith.addf %14, %8 : vector<16x16xf32>
    %cst_15 = arith.constant dense<0xFF800000> : vector<16xf32>
    %16 = vector.multi_reduction <maximumf>, %15, %cst_15 [1] : vector<16x16xf32> to vector<16xf32>
    %17 = vector.shape_cast %16 : vector<16xf32> to vector<16x1xf32>
    %18 = vector.broadcast %17 : vector<16x1xf32> to vector<16x16xf32>
    %19 = arith.subf %15, %18 : vector<16x16xf32>
    %20 = math.exp %19 : vector<16x16xf32>
    %cst_16 = arith.constant dense<0.000000e+00> : vector<16xf32>
    %21 = vector.multi_reduction <add>, %20, %cst_16 [1] : vector<16x16xf32> to vector<16xf32>
    %22 = vector.shape_cast %21 : vector<16xf32> to vector<16x1xf32>
    %23 = tpu.reciprocal %22 {approx = true} : vector<16x1xf32> -> vector<16x1xf32>
    %24 = vector.broadcast %23 : vector<16x1xf32> to vector<16x16xf32>
    %25 = arith.mulf %20, %24 : vector<16x16xf32>
    %26 = arith.truncf %25 : vector<16x16xf32> to vector<16x16xbf16>
    %cst_17 = arith.constant dense<0.000000e+00> : vector<16x8xf32>
    %27 = tpu.matmul %26, %11, %cst_17 {dimension_numbers = #tpu.dot_dimension_numbers<[1], [0], [0], [1], [0, 0, 1, 1], [], []>} : vector<16x16xbf16>, vector<16x8xbf16>, vector<16x8xf32> -> vector<16x8xf32>
    %28 = arith.truncf %27 : vector<16x8xf32> to vector<16x8xbf16>
    %c0_18 = arith.constant 0 : index
    %c0_19 = arith.constant 0 : index
    %29 = vector.load %arg8[%c0_18, %c0_19] : memref<16x32xbf16, #tpu.memory_space<vmem>>, vector<16x8xbf16>
    tpu.vector_store %arg8[%c0_18, %c0_19], %28 {strides = array<i32>} : memref<16x32xbf16, #tpu.memory_space<vmem>>, vector<16x8xbf16>,
    %c0_20 = arith.constant 0 : index
    %c8 = arith.constant 8 : index
    %30 = vector.load %arg7[%c0_20, %c8] : memref<16x96xbf16, #tpu.memory_space<vmem>>, vector<16x8xbf16>
    %c0_21 = arith.constant 0 : index
    %c40 = arith.constant 40 : index
    %31 = vector.load %arg7[%c0_21, %c40] : memref<16x96xbf16, #tpu.memory_space<vmem>>, vector<16x8xbf16>
    %c0_22 = arith.constant 0 : index
    %c72 = arith.constant 72 : index
    %32 = vector.load %arg7[%c0_22, %c72] : memref<16x96xbf16, #tpu.memory_space<vmem>>, vector<16x8xbf16>
    %cst_23 = arith.constant dense<0.000000e+00> : vector<16x16xf32>
    %33 = tpu.matmul %30, %31, %cst_23 {dimension_numbers = #tpu.dot_dimension_numbers<[1], [1], [0], [0], [0, 0, 1, 0], [], []>} : vector<16x8xbf16>, vector<16x8xbf16>, vector<16x16xf32> -> vector<16x16xf32>
    %34 = vector.broadcast %7 : f32 to vector<16x16xf32>
    %35 = arith.mulf %33, %34 : vector<16x16xf32>
    %36 = arith.addf %35, %8 : vector<16x16xf32>
    %cst_24 = arith.constant dense<0xFF800000> : vector<16xf32>
    %37 = vector.multi_reduction <maximumf>, %36, %cst_24 [1] : vector<16x16xf32> to vector<16xf32>
    %38 = vector.shape_cast %37 : vector<16xf32> to vector<16x1xf32>
    %39 = vector.broadcast %38 : vector<16x1xf32> to vector<16x16xf32>
    %40 = arith.subf %36, %39 : vector<16x16xf32>
    %41 = math.exp %40 : vector<16x16xf32>
    %cst_25 = arith.constant dense<0.000000e+00> : vector<16xf32>
    %42 = vector.multi_reduction <add>, %41, %cst_25 [1] : vector<16x16xf32> to vector<16xf32>
    %43 = vector.shape_cast %42 : vector<16xf32> to vector<16x1xf32>
    %44 = tpu.reciprocal %43 {approx = true} : vector<16x1xf32> -> vector<16x1xf32>
    %45 = vector.broadcast %44 : vector<16x1xf32> to vector<16x16xf32>
    %46 = arith.mulf %41, %45 : vector<16x16xf32>
    %47 = arith.truncf %46 : vector<16x16xf32> to vector<16x16xbf16>
    %cst_26 = arith.constant dense<0.000000e+00> : vector<16x8xf32>
    %48 = tpu.matmul %47, %32, %cst_26 {dimension_numbers = #tpu.dot_dimension_numbers<[1], [0], [0], [1], [0, 0, 1, 1], [], []>} : vector<16x16xbf16>, vector<16x8xbf16>, vector<16x8xf32> -> vector<16x8xf32>
    %49 = arith.truncf %48 : vector<16x8xf32> to vector<16x8xbf16>
    %c0_27 = arith.constant 0 : index
    %c8_28 = arith.constant 8 : index
    %50 = vector.load %arg8[%c0_27, %c8_28] : memref<16x32xbf16, #tpu.memory_space<vmem>>, vector<16x8xbf16>
    tpu.vector_store %arg8[%c0_27, %c8_28], %49 {strides = array<i32>} : memref<16x32xbf16, #tpu.memory_space<vmem>>, vector<16x8xbf16>,
    %c0_29 = arith.constant 0 : index
    %c16 = arith.constant 16 : index
    %51 = vector.load %arg7[%c0_29, %c16] : memref<16x96xbf16, #tpu.memory_space<vmem>>, vector<16x8xbf16>
    %c0_30 = arith.constant 0 : index
    %c48 = arith.constant 48 : index
    %52 = vector.load %arg7[%c0_30, %c48] : memref<16x96xbf16, #tpu.memory_space<vmem>>, vector<16x8xbf16>
    %c0_31 = arith.constant 0 : index
    %c80 = arith.constant 80 : index
    %53 = vector.load %arg7[%c0_31, %c80] : memref<16x96xbf16, #tpu.memory_space<vmem>>, vector<16x8xbf16>
    %cst_32 = arith.constant dense<0.000000e+00> : vector<16x16xf32>
    %54 = tpu.matmul %51, %52, %cst_32 {dimension_numbers = #tpu.dot_dimension_numbers<[1], [1], [0], [0], [0, 0, 1, 0], [], []>} : vector<16x8xbf16>, vector<16x8xbf16>, vector<16x16xf32> -> vector<16x16xf32>
    %55 = vector.broadcast %7 : f32 to vector<16x16xf32>
    %56 = arith.mulf %54, %55 : vector<16x16xf32>
    %57 = arith.addf %56, %8 : vector<16x16xf32>
    %cst_33 = arith.constant dense<0xFF800000> : vector<16xf32>
    %58 = vector.multi_reduction <maximumf>, %57, %cst_33 [1] : vector<16x16xf32> to vector<16xf32>
    %59 = vector.shape_cast %58 : vector<16xf32> to vector<16x1xf32>
    %60 = vector.broadcast %59 : vector<16x1xf32> to vector<16x16xf32>
    %61 = arith.subf %57, %60 : vector<16x16xf32>
    %62 = math.exp %61 : vector<16x16xf32>
    %cst_34 = arith.constant dense<0.000000e+00> : vector<16xf32>
    %63 = vector.multi_reduction <add>, %62, %cst_34 [1] : vector<16x16xf32> to vector<16xf32>
    %64 = vector.shape_cast %63 : vector<16xf32> to vector<16x1xf32>
    %65 = tpu.reciprocal %64 {approx = true} : vector<16x1xf32> -> vector<16x1xf32>
    %66 = vector.broadcast %65 : vector<16x1xf32> to vector<16x16xf32>
    %67 = arith.mulf %62, %66 : vector<16x16xf32>
    %68 = arith.truncf %67 : vector<16x16xf32> to vector<16x16xbf16>
    %cst_35 = arith.constant dense<0.000000e+00> : vector<16x8xf32>
    %69 = tpu.matmul %68, %53, %cst_35 {dimension_numbers = #tpu.dot_dimension_numbers<[1], [0], [0], [1], [0, 0, 1, 1], [], []>} : vector<16x16xbf16>, vector<16x8xbf16>, vector<16x8xf32> -> vector<16x8xf32>
    %70 = arith.truncf %69 : vector<16x8xf32> to vector<16x8xbf16>
    %c0_36 = arith.constant 0 : index
    %c16_37 = arith.constant 16 : index
    %71 = vector.load %arg8[%c0_36, %c16_37] : memref<16x32xbf16, #tpu.memory_space<vmem>>, vector<16x8xbf16>
    tpu.vector_store %arg8[%c0_36, %c16_37], %70 {strides = array<i32>} : memref<16x32xbf16, #tpu.memory_space<vmem>>, vector<16x8xbf16>,
    %c0_38 = arith.constant 0 : index
    %c24 = arith.constant 24 : index
    %72 = vector.load %arg7[%c0_38, %c24] : memref<16x96xbf16, #tpu.memory_space<vmem>>, vector<16x8xbf16>
    %c0_39 = arith.constant 0 : index
    %c56 = arith.constant 56 : index
    %73 = vector.load %arg7[%c0_39, %c56] : memref<16x96xbf16, #tpu.memory_space<vmem>>, vector<16x8xbf16>
    %c0_40 = arith.constant 0 : index
    %c88 = arith.constant 88 : index
    %74 = vector.load %arg7[%c0_40, %c88] : memref<16x96xbf16, #tpu.memory_space<vmem>>, vector<16x8xbf16>
    %cst_41 = arith.constant dense<0.000000e+00> : vector<16x16xf32>
    %75 = tpu.matmul %72, %73, %cst_41 {dimension_numbers = #tpu.dot_dimension_numbers<[1], [1], [0], [0], [0, 0, 1, 0], [], []>} : vector<16x8xbf16>, vector<16x8xbf16>, vector<16x16xf32> -> vector<16x16xf32>
    %76 = vector.broadcast %7 : f32 to vector<16x16xf32>
    %77 = arith.mulf %75, %76 : vector<16x16xf32>
    %78 = arith.addf %77, %8 : vector<16x16xf32>
    %cst_42 = arith.constant dense<0xFF800000> : vector<16xf32>
    %79 = vector.multi_reduction <maximumf>, %78, %cst_42 [1] : vector<16x16xf32> to vector<16xf32>
    %80 = vector.shape_cast %79 : vector<16xf32> to vector<16x1xf32>
    %81 = vector.broadcast %80 : vector<16x1xf32> to vector<16x16xf32>
    %82 = arith.subf %78, %81 : vector<16x16xf32>
    %83 = math.exp %82 : vector<16x16xf32>
    %cst_43 = arith.constant dense<0.000000e+00> : vector<16xf32>
    %84 = vector.multi_reduction <add>, %83, %cst_43 [1] : vector<16x16xf32> to vector<16xf32>
    %85 = vector.shape_cast %84 : vector<16xf32> to vector<16x1xf32>
    %86 = tpu.reciprocal %85 {approx = true} : vector<16x1xf32> -> vector<16x1xf32>
    %87 = vector.broadcast %86 : vector<16x1xf32> to vector<16x16xf32>
    %88 = arith.mulf %83, %87 : vector<16x16xf32>
    %89 = arith.truncf %88 : vector<16x16xf32> to vector<16x16xbf16>
    %cst_44 = arith.constant dense<0.000000e+00> : vector<16x8xf32>
    %90 = tpu.matmul %89, %74, %cst_44 {dimension_numbers = #tpu.dot_dimension_numbers<[1], [0], [0], [1], [0, 0, 1, 1], [], []>} : vector<16x16xbf16>, vector<16x8xbf16>, vector<16x8xf32> -> vector<16x8xf32>
    %91 = arith.truncf %90 : vector<16x8xf32> to vector<16x8xbf16>
    %c0_45 = arith.constant 0 : index
    %c24_46 = arith.constant 24 : index
    %92 = vector.load %arg8[%c0_45, %c24_46] : memref<16x32xbf16, #tpu.memory_space<vmem>>, vector<16x8xbf16>
    tpu.vector_store %arg8[%c0_45, %c24_46], %91 {strides = array<i32>} : memref<16x32xbf16, #tpu.memory_space<vmem>>, vector<16x8xbf16>,
    %c0_47 = arith.constant 0 : index
    %c0_48 = arith.constant 0 : index
    %93 = vector.load %arg8[%c0_47, %c0_48] : memref<16x32xbf16, #tpu.memory_space<vmem>>, vector<16x32xbf16>
    %c0_49 = arith.constant 0 : index
    %c0_50 = arith.constant 0 : index
    %94 = vector.load %arg3[%c0_49, %c0_50] : memref<32x32xbf16, #tpu.memory_space<vmem>>, vector<32x32xbf16>
    %cst_51 = arith.constant dense<0.000000e+00> : vector<16x32xf32>
    %95 = tpu.matmul %93, %94, %cst_51 {dimension_numbers = #tpu.dot_dimension_numbers<[1], [0], [0], [1], [0, 0, 1, 1], [], []>} : vector<16x32xbf16>, vector<32x32xbf16>, vector<16x32xf32> -> vector<16x32xf32>
    %c0_52 = arith.constant 0 : index
    %c0_53 = arith.constant 0 : index
    %96 = vector.load %arg4[%c0_52, %c0_53] : memref<1x32xf32, #tpu.memory_space<vmem>>, vector<1x32xf32>
    %97 = vector.broadcast %96 : vector<1x32xf32> to vector<16x32xf32>
    %98 = arith.addf %95, %97 : vector<16x32xf32>
    %99 = vector.shape_cast %98 : vector<16x32xf32> to vector<1x16x32xf32>
    %c0_54 = arith.constant 0 : index
    %c0_55 = arith.constant 0 : index
    %c0_56 = arith.constant 0 : index
    %100 = vector.load %arg6[%c0_54, %c0_55, %c0_56] : memref<1x16x32xf32, #tpu.memory_space<vmem>>, vector<1x16x32xf32>
    tpu.vector_store %arg6[%c0_54, %c0_55, %c0_56], %99 {strides = array<i32>} : memref<1x16x32xf32, #tpu.memory_space<vmem>>, vector<1x16x32xf32>,
    return
  }
  func.func @transform_0(%arg0: i32) -> (i32, i32, i32) {
    %c0_i32 = arith.constant 0 : i32
    %c0_i32_0 = arith.constant 0 : i32
    %c0_i32_1 = arith.constant 0 : i32
    return %arg0, %c0_i32, %c0_i32_0 : i32, i32, i32
  }
  func.func @transform_1(%arg0: i32) -> (i32, i32) {
    %c0_i32 = arith.constant 0 : i32
    %c0_i32_0 = arith.constant 0 : i32
    %c0_i32_1 = arith.constant 0 : i32
    return %c0_i32, %c0_i32_0 : i32, i32
  }
  func.func @transform_2(%arg0: i32) -> (i32, i32) {
    %c0_i32 = arith.constant 0 : i32
    %c0_i32_0 = arith.constant 0 : i32
    %c0_i32_1 = arith.constant 0 : i32
    return %c0_i32, %c0_i32_0 : i32, i32
  }
  func.func @transform_3(%arg0: i32) -> (i32, i32) {
    %c0_i32 = arith.constant 0 : i32
    %c0_i32_0 = arith.constant 0 : i32
    %c0_i32_1 = arith.constant 0 : i32
    return %c0_i32, %c0_i32_0 : i32, i32
  }
  func.func @transform_4(%arg0: i32) -> (i32, i32) {
    %c0_i32 = arith.constant 0 : i32
    %c0_i32_0 = arith.constant 0 : i32
    %c0_i32_1 = arith.constant 0 : i32
    return %c0_i32, %c0_i32_0 : i32, i32
  }
  func.func @transform_5(%arg0: i32) -> (i32, i32, i32) {
    %c0_i32 = arith.constant 0 : i32
    %c0_i32_0 = arith.constant 0 : i32
    %c0_i32_1 = arith.constant 0 : i32
    return %arg0, %c0_i32, %c0_i32_0 : i32, i32, i32
  }
}

</mosaic_0001>

<llo_original>
// kernel: tpu_custom_call.1
$region0: #{tpu_custom_call.1}
  #allocation0 [shape = 'u32[]', space=smem, size = 0x4, offset = 0x4, fixed_abs, tag = 'smem constant byte address 0x4 - core index']
  #allocation1 [shape = 'u32[144,128]{1,0:T(1,128)}', space=vmem, size = 0x12000, scoped, tag = 'internal scratch']
  #allocation2 [shape = 'bf16[16,96]{1,0:T(16,128)(2,1)}', space=vmem, size = 0x1000, scoped, tag = 'scratch operand']
  #allocation3 [shape = 'bf16[16,32]{1,0:T(16,128)(2,1)}', space=vmem, size = 0x1000, scoped, tag = 'scratch operand']
  %s0 = inlined_call_operand.hbm [shape: f32[2,16,32], index: 0, kind: input, shape index: {}]
  %s1 = inlined_call_operand.hbm [shape: bf16[32,96], index: 1, kind: input, shape index: {}]
  %s2 = inlined_call_operand.hbm [shape: bf16[32,32], index: 2, kind: input, shape index: {}]
  %s3 = inlined_call_operand.vmem [shape: f32[1,32], index: 3, kind: input, shape index: {}]
  %s4 = inlined_call_operand.hbm [shape: f32[16,16], index: 4, kind: input, shape index: {}]
  %s5 = inlined_call_operand.hbm [shape: f32[2,16,32], index: 5, kind: output, shape index: {}]
  %s6 = sld [smem:[#allocation0]]
  $region69: #{tpu_custom_call.1} parent=0
    _
  %s8 = ssub.s32 1, %s6
  %s9 = scalar_select 0, %s8, %s6
  $region1: #{tpu_custom_call.1} parent=0
    #allocation4 [shape = 'u8[16384]{0}', space=vmem, size = 0x4000, scoped, tag = 'input window, operand 0']
    #allocation5 [shape = 's32[2]{0}', space=sflag, size = 0x8, scoped, tag = 'scoped memory for tpu_custom_call.1']
    #allocation6 [shape = 's32[2]{0}', space=sflag, size = 0x8, scoped, tag = 'scoped memory for tpu_custom_call.1']
    #allocation7 [shape = 'u8[8192]{0}', space=vmem, size = 0x2000, scoped, tag = 'input window, operand 1, single buffered']
    #allocation8 [shape = 's32[1]{0}', space=sflag, size = 0x4, scoped, tag = 'scoped memory for tpu_custom_call.1']
    #allocation9 [shape = 'u8[8192]{0}', space=vmem, size = 0x2000, scoped, tag = 'input window, operand 2, single buffered']
    #allocation10 [shape = 'u8[8192]{0}', space=vmem, size = 0x2000, scoped, tag = 'input window, operand 4, single buffered']
    #allocation11 [shape = 's32[1]{0}', space=sflag, size = 0x4, scoped, tag = 'scoped memory for tpu_custom_call.1']
    #allocation12 [shape = 'u8[16384]{0}', space=vmem, size = 0x4000, scoped, tag = 'output window, operand 0']
    %10 = vsyncpa [#allocation5], 0
    %s11 = scalar_lea.sflag [#allocation5], 1
    %12 = vsyncpa %s11, 0
    %13 = vsyncpa [#allocation8], 0
    %14 = vsyncpa [#allocation11], 0
    %15 = vsyncpa [#allocation6], 0
    %s16 = scalar_lea.sflag [#allocation6], 1
    %17 = vsyncpa %s16, 0
    loop: start=0, step=1, limit=4
    $region2: #{tpu_custom_call.1} parent=1 // loop_pre_header
      _
    $region3: #{tpu_custom_call.1} parent=1 // loop_header
      %s19 = sphi 0, %s23
      %p20 = scmp.ge.s32.totalorder %s19, 4
      %s29 = sphi 0, %s31
      %s32 = sphi 0, %s29
      %s33 = sphi 0, %s32
      %s49 = sphi 0, %s33
      %s53 = sphi 0, %s53
      %s55 = sphi 0, %s53
      %s56 = sphi 0, %s55
      %s70 = sphi 0, %s56
      %s74 = sphi 0, %s74
      %s76 = sphi 0, %s74
      %s77 = sphi 0, %s76
      %s91 = sphi 0, %s77
      %s95 = sphi 0, %s95
      %s97 = sphi 0, %s95
      %s98 = sphi 0, %s97
      %s112 = sphi 0, %s98
      %s116 = sphi 0, %s116
      %s118 = sphi 0, %s116
      %s119 = sphi 0, %s118
      %s133 = sphi 0, %s119
      %s139 = sphi 0, %s141
      %s142 = sphi 0, %s139
      %s143 = sphi 0, %s142
      %s159 = sphi 0, %s143
    $region4: #{tpu_custom_call.1} parent=1 // loop_header_branch
      %22 = sbr.rel (%p20) target = $region8
    $region5: #{tpu_custom_call.1} parent=1 // loop_body
      %s24 = ssub.s32 %s19, 1
      %s25 = ssub.s32 %s19, 2
      %s26 = sadd.s32 %s19, 1
      %s27 = ssub.s32 %s19, %s26
      %p28 = scmp.eq.s32.totalorder %s27, 0
      %s30 = sadd.s32 %s29, 1
      %s31 = scalar_select %p28, %s29, %s30
      %p34 = pneg %p28
      %p35 = scmp.eq.s32.totalorder %s19, 1
      %p36 = por %p34, %p35
      %p37 = scmp.ne.s32.totalorder %s29, %s32
      %p38 = scmp.eq.s32.totalorder %s19, 0
      %p39 = por %p37, %p38
      %p40 = scmp.ne.s32.totalorder %s29, %s32
      %p41 = scmp.eq.s32.totalorder %s24, 1
      %p42 = por %p40, %p41
      %p43 = scmp.ne.s32.totalorder %s32, %s33
      %p44 = scmp.eq.s32.totalorder %s24, 0
      %p45 = por %p43, %p44
      %p46 = scmp.ne.s32.totalorder %s32, %s33
      %p47 = scmp.eq.s32.totalorder %s25, 1
      %p48 = por %p46, %p47
      %p50 = scmp.ne.s32.totalorder %s33, %s49
      %p51 = scmp.eq.s32.totalorder %s25, 0
      %p52 = por %p50, %p51
      %s54 = sadd.s32 %s53, 1
      %p57 = scmp.eq.s32.totalorder %s19, 1
      %p58 = scmp.ne.s32.totalorder %s53, %s55
      %p59 = scmp.eq.s32.totalorder %s19, 0
      %p60 = por %p58, %p59
      %p61 = scmp.ne.s32.totalorder %s53, %s55
      %p62 = scmp.eq.s32.totalorder %s24, 1
      %p63 = por %p61, %p62
      %p64 = scmp.ne.s32.totalorder %s55, %s56
      %p65 = scmp.eq.s32.totalorder %s24, 0
      %p66 = por %p64, %p65
      %p67 = scmp.ne.s32.totalorder %s55, %s56
      %p68 = scmp.eq.s32.totalorder %s25, 1
      %p69 = por %p67, %p68
      %p71 = scmp.ne.s32.totalorder %s56, %s70
      %p72 = scmp.eq.s32.totalorder %s25, 0
      %p73 = por %p71, %p72
      %s75 = sadd.s32 %s74, 1
      %p78 = scmp.eq.s32.totalorder %s19, 1
      %p79 = scmp.ne.s32.totalorder %s74, %s76
      %p80 = scmp.eq.s32.totalorder %s19, 0
      %p81 = por %p79, %p80
      %p82 = scmp.ne.s32.totalorder %s74, %s76
      %p83 = scmp.eq.s32.totalorder %s24, 1
      %p84 = por %p82, %p83
      %p85 = scmp.ne.s32.totalorder %s76, %s77
      %p86 = scmp.eq.s32.totalorder %s24, 0
      %p87 = por %p85, %p86
      %p88 = scmp.ne.s32.totalorder %s76, %s77
      %p89 = scmp.eq.s32.totalorder %s25, 1
      %p90 = por %p88, %p89
      %p92 = scmp.ne.s32.totalorder %s77, %s91
      %p93 = scmp.eq.s32.totalorder %s25, 0
      %p94 = por %p92, %p93
      %s96 = sadd.s32 %s95, 1
      %p99 = scmp.eq.s32.totalorder %s19, 1
      %p100 = scmp.ne.s32.totalorder %s95, %s97
      %p101 = scmp.eq.s32.totalorder %s19, 0
      %p102 = por %p100, %p101
      %p103 = scmp.ne.s32.totalorder %s95, %s97
      %p104 = scmp.eq.s32.totalorder %s24, 1
      %p105 = por %p103, %p104
      %p106 = scmp.ne.s32.totalorder %s97, %s98
      %p107 = scmp.eq.s32.totalorder %s24, 0
      %p108 = por %p106, %p107
      %p109 = scmp.ne.s32.totalorder %s97, %s98
      %p110 = scmp.eq.s32.totalorder %s25, 1
      %p111 = por %p109, %p110
      %p113 = scmp.ne.s32.totalorder %s98, %s112
      %p114 = scmp.eq.s32.totalorder %s25, 0
      %p115 = por %p113, %p114
      %s117 = sadd.s32 %s116, 1
      %p120 = scmp.eq.s32.totalorder %s19, 1
      %p121 = scmp.ne.s32.totalorder %s116, %s118
      %p122 = scmp.eq.s32.totalorder %s19, 0
      %p123 = por %p121, %p122
      %p124 = scmp.ne.s32.totalorder %s116, %s118
      %p125 = scmp.eq.s32.totalorder %s24, 1
      %p126 = por %p124, %p125
      %p127 = scmp.ne.s32.totalorder %s118, %s119
      %p128 = scmp.eq.s32.totalorder %s24, 0
      %p129 = por %p127, %p128
      %p130 = scmp.ne.s32.totalorder %s118, %s119
      %p131 = scmp.eq.s32.totalorder %s25, 1
      %p132 = por %p130, %p131
      %p134 = scmp.ne.s32.totalorder %s119, %s133
      %p135 = scmp.eq.s32.totalorder %s25, 0
      %p136 = por %p134, %p135
      %s137 = ssub.s32 %s19, %s26
      %p138 = scmp.eq.s32.totalorder %s137, 0
      %s140 = sadd.s32 %s139, 1
      %s141 = scalar_select %p138, %s139, %s140
      %p144 = pneg %p138
      %p145 = scmp.eq.s32.totalorder %s19, 1
      %p146 = por %p144, %p145
      %p147 = scmp.ne.s32.totalorder %s139, %s142
      %p148 = scmp.eq.s32.totalorder %s19, 0
      %p149 = por %p147, %p148
      %p150 = scmp.ne.s32.totalorder %s139, %s142
      %p151 = scmp.eq.s32.totalorder %s24, 1
      %p152 = por %p150, %p151
      %p153 = scmp.ne.s32.totalorder %s142, %s143
      %p154 = scmp.eq.s32.totalorder %s24, 0
      %p155 = por %p153, %p154
      %p156 = scmp.ne.s32.totalorder %s142, %s143
      %p157 = scmp.eq.s32.totalorder %s25, 1
      %p158 = por %p156, %p157
      %p160 = scmp.ne.s32.totalorder %s143, %s159
      %p161 = scmp.eq.s32.totalorder %s25, 0
      %p162 = por %p160, %p161
      %p163 = scmp.le.s32.totalorder 1, %s19
      %p164 = scmp.lt.s32.totalorder %s19, 3
      %p165 = pnand %p163, %p164
      %p166 = pneg %p165
      // Predicated region
      $region9: #{tpu_custom_call.1} parent=5 // pred_check
        _
      $region10: #{tpu_custom_call.1} parent=5 // pred_check_branch
        %168 = sbr.rel (%p165) target = $region12
      $region11: #{tpu_custom_call.1} parent=5 // pred_region
        %s169 = ssub.s32 %s19, 1
        // Predicated region
        $region13: #{tpu_custom_call.1} parent=11 // pred_check
          %p170 = pneg %p66
        $region14: #{tpu_custom_call.1} parent=11 // pred_check_branch
          %172 = sbr.rel (%p170) target = $region16
        $region15: #{tpu_custom_call.1} parent=11 // pred_region
          %s174 = ssub.s32 256, 256
          %175 = vsyncadd [#allocation8], %s174
          %s176 = sshll.u32 [#allocation7], 4
          %s177 = int_to_ptr.vmem [resolvable:$true] %s176
          %182 = dma.hbm_to_vmem [thread:$0]  %s1, 256, %s177, [#allocation8], 64, 64, 4
        $region16: #{tpu_custom_call.1} parent=11 // pred_fallthru
          _
        // Predicated region
        $region17: #{tpu_custom_call.1} parent=11 // pred_check
          %p183 = pneg %p87
        $region18: #{tpu_custom_call.1} parent=11 // pred_check_branch
          %185 = sbr.rel (%p183) target = $region20
        $region19: #{tpu_custom_call.1} parent=11 // pred_region
          %s187 = ssub.s32 256, 256
          %188 = vsyncadd [#allocation8], %s187
          %s189 = sshll.u32 [#allocation9], 4
          %s190 = int_to_ptr.vmem [resolvable:$true] %s189
          %195 = dma.hbm_to_vmem [thread:$0]  %s2, 256, %s190, [#allocation8], 64, 64, 4
        $region20: #{tpu_custom_call.1} parent=11 // pred_fallthru
          _
        // Predicated region
        $region21: #{tpu_custom_call.1} parent=11 // pred_check
          %p196 = pneg %p108
        $region22: #{tpu_custom_call.1} parent=11 // pred_check_branch
          %198 = sbr.rel (%p196) target = $region24
        $region23: #{tpu_custom_call.1} parent=11 // pred_region
          _
        $region24: #{tpu_custom_call.1} parent=11 // pred_fallthru
          _
        // Predicated region
        $region25: #{tpu_custom_call.1} parent=11 // pred_check
          %p199 = pneg %p129
        $region26: #{tpu_custom_call.1} parent=11 // pred_check_branch
          %201 = sbr.rel (%p199) target = $region28
        $region27: #{tpu_custom_call.1} parent=11 // pred_region
          %s203 = ssub.s32 256, 256
          %204 = vsyncadd [#allocation11], %s203
          %s205 = sshll.u32 [#allocation10], 4
          %s206 = int_to_ptr.vmem [resolvable:$true] %s205
          %211 = dma.hbm_to_vmem [thread:$0]  %s4, 256, %s206, [#allocation11], 128, 128, 8
        $region28: #{tpu_custom_call.1} parent=11 // pred_fallthru
          _
      $region12: #{tpu_custom_call.1} parent=5 // pred_fallthru
        _
      %p212 = scmp.lt.s32.totalorder %s19, 2
      // Predicated region
      $region29: #{tpu_custom_call.1} parent=5 // pred_check
        %p213 = pneg %p212
      $region30: #{tpu_custom_call.1} parent=5 // pred_check_branch
        %215 = sbr.rel (%p213) target = $region32
      $region31: #{tpu_custom_call.1} parent=5 // pred_region
        // Predicated region
        $region33: #{tpu_custom_call.1} parent=31 // pred_check
          %p216 = pneg %p39
        $region34: #{tpu_custom_call.1} parent=31 // pred_check_branch
          %218 = sbr.rel (%p216) target = $region36
        $region35: #{tpu_custom_call.1} parent=31 // pred_region
          %s219 = sand.u32 %s29, 1
          %s220 = scalar_lea.sflag [#allocation5], %s219
          %s221 = sand.u32 %s29, 1
          %s222 = smul.addr %s221, 16
          %s223 = scalar_lea.vmem [#allocation4], %s222
          %s225 = ssub.s32 256, 256
          %226 = vsyncadd %s220, %s225
          %s227 = smul.addr %s19, 2
          %s228 = smul.addr %s227, 128
          %s229 = scalar_lea.hbm %s0, %s228
          %s230 = sshll.u32 %s223, 4
          %s231 = int_to_ptr.vmem [resolvable:$true] %s230
          %236 = dma.hbm_to_vmem [thread:$0]  %s229, 256, %s231, %s220, 128, 128, 8
        $region36: #{tpu_custom_call.1} parent=31 // pred_fallthru
          _
      $region32: #{tpu_custom_call.1} parent=5 // pred_fallthru
        _
      %p237 = scmp.le.s32.totalorder 1, %s19
      %p238 = scmp.lt.s32.totalorder %s19, 3
      %p239 = pnand %p237, %p238
      %p240 = pneg %p239
      // Predicated region
      $region37: #{tpu_custom_call.1} parent=5 // pred_check
        _
      $region38: #{tpu_custom_call.1} parent=5 // pred_check_branch
        %242 = sbr.rel (%p239) target = $region40
      $region39: #{tpu_custom_call.1} parent=5 // pred_region
        %s243 = ssub.s32 %s19, 1
        %s244 = sand.u32 %s32, 1
        %s245 = scalar_lea.sflag [#allocation5], %s244
        %s246 = sand.u32 %s32, 1
        %s247 = smul.addr %s246, 16
        %s248 = scalar_lea.vmem [#allocation4], %s247
        // Predicated region
        $region41: #{tpu_custom_call.1} parent=39 // pred_check
          %p249 = pneg %p45
        $region42: #{tpu_custom_call.1} parent=39 // pred_check_branch
          %251 = sbr.rel (%p249) target = $region44
        $region43: #{tpu_custom_call.1} parent=39 // pred_region
          %252 = dma.done %s245, 256
        $region44: #{tpu_custom_call.1} parent=39 // pred_fallthru
          _
        // Predicated region
        $region45: #{tpu_custom_call.1} parent=39 // pred_check
          %p253 = pneg %p66
        $region46: #{tpu_custom_call.1} parent=39 // pred_check_branch
          %255 = sbr.rel (%p253) target = $region48
        $region47: #{tpu_custom_call.1} parent=39 // pred_region
          %256 = dma.done [#allocation8], 256
        $region48: #{tpu_custom_call.1} parent=39 // pred_fallthru
          _
        // Predicated region
        $region49: #{tpu_custom_call.1} parent=39 // pred_check
          %p257 = pneg %p87
        $region50: #{tpu_custom_call.1} parent=39 // pred_check_branch
          %259 = sbr.rel (%p257) target = $region52
        $region51: #{tpu_custom_call.1} parent=39 // pred_region
          %260 = dma.done [#allocation8], 256
        $region52: #{tpu_custom_call.1} parent=39 // pred_fallthru
          _
        // Predicated region
        $region53: #{tpu_custom_call.1} parent=39 // pred_check
          %p261 = pneg %p129
        $region54: #{tpu_custom_call.1} parent=39 // pred_check_branch
          %263 = sbr.rel (%p261) target = $region56
        $region55: #{tpu_custom_call.1} parent=39 // pred_region
          %264 = dma.done [#allocation11], 256
        $region56: #{tpu_custom_call.1} parent=39 // pred_fallthru
          _
        %s265 = sand.u32 %s32, 1
        %s266 = scalar_lea.sflag [#allocation5], %s265
        %s267 = sand.u32 %s32, 1
        %s268 = smul.addr %s267, 16
        %s269 = scalar_lea.vmem [#allocation4], %s268
        %p270 = pneg %p45
        %p271 = pneg %p42
        %p272 = pneg %p66
        %p273 = pneg %p63
        %p274 = pneg %p87
        %p275 = pneg %p84
        %p276 = pneg %p108
        %p277 = pneg %p105
        %p278 = pneg %p129
        %p279 = pneg %p126
        %p280 = pneg %p155
        %p281 = pneg %p152
        %s282 = sand.u32 %s142, 1
        %s283 = scalar_lea.sflag [#allocation6], %s282
        %s284 = sand.u32 %s142, 1
        %s285 = smul.addr %s284, 16
        %s286 = scalar_lea.vmem [#allocation12], %s285
        %v288 = vld [vmem:[%s248] sm:$0xff]
        %v289 = vld [vmem:[%s248 + $0x8] sm:$0xff]
        %v290 = vpack.c.bf16 %v289, %v288
        %v291 = vld [vmem:[#allocation7] sm:$0xf]
        %v292 = vld [vmem:[#allocation7 + $0x4] sm:$0xf]
        %v293 = vld [vmem:[#allocation7 + $0x8] sm:$0xf]
        %v294 = vld [vmem:[#allocation7 + $0xc] sm:$0xf]
        %v299 = vunpack.c.l.b16 %v291
        %v300 = vunpack.c.l.b16 %v292
        %v301 = vunpack.c.l.b16 %v293
        %v302 = vunpack.c.l.b16 %v294
        %v303 = vpack.c.b16 %v300, %v299
        %v304 = vpack.c.b16 %v302, %v301
        %vm307 = vcmask 261120
        %v309 = vsel %vm307, %v290, 0
        %311 = vmatprep.subr.bf16.mxu0 0
        %312 = vmatpush1.bf16.msra.mxu0 %v303
        %313 = vmatprep.subr.bf16.mxu0 0
        %314 = vmatpush1.bf16.msra.mxu0 %v304
        %315 = vmatprep.subr.bf16.mxu0 0
        %316 = vmatpush1.bf16.msra.mxu0 0
        %317 = vmatprep.subr.bf16.mxu0 0
        %318 = vmatpush1.bf16.msra.mxu0 0
        %319 = vmatprep.subr.bf16.mxu0 0
        %320 = vmatpush1.bf16.msra.mxu0 0
        %321 = vmatprep.subr.bf16.mxu0 0
        %322 = vmatpush1.bf16.msra.mxu0 0
        %323 = vmatprep.subr.bf16.mxu0 0
        %324 = vmatpush1.bf16.msra.mxu0 0
        %325 = vmatprep.subr.bf16.mxu0 0
        %326 = vmatpush1.bf16.msra.mxu0 0
        %327 = vmatprep.subr.bf16.mxu0 0
        %328 = vmatpush1.bf16.msra.mxu0 0
        %329 = vmatprep.subr.bf16.mxu0 0
        %330 = vmatpush1.bf16.msra.mxu0 0
        %331 = vmatprep.subr.bf16.mxu0 0
        %332 = vmatpush1.bf16.msra.mxu0 0
        %333 = vmatprep.subr.bf16.mxu0 0
        %334 = vmatpush1.bf16.msra.mxu0 0
        %335 = vmatprep.subr.bf16.mxu0 0
        %336 = vmatpush1.bf16.msra.mxu0 0
        %337 = vmatprep.subr.bf16.mxu0 0
        %338 = vmatpush1.bf16.msra.mxu0 0
        %339 = vmatprep.subr.bf16.mxu0 0
        %340 = vmatpush1.bf16.msra.mxu0 0
        %341 = vmatprep.subr.bf16.mxu0 0
        %342 = vmatpush1.bf16.msra.mxu0 0
        %343 = vmatprep.mubr.bf16.mxu0 0
        %344 = vmatmul.mubr.bf16.gmra.mrb[0].mxu0 %v309
        %v345 = vpop.f32.mrb[0].mxu0
        %v346 = vadd.f32 0.0, %v345
        %v347 = vpop.f32.mrb[0].mxu0
        %v348 = vpop.f32.mrb[0].mxu0
        %v349 = vadd.f32 0.0, %v348
        %v350 = vpop.f32.mrb[0].mxu0
        %351 = vdwg.mxu0
        %v352 = vpack.c.bf16 %v349, %v346
        %vm353 = vcmask 785408
        %354 = vst.msk [vmem:[#allocation2] sm:$0xff] %vm353, %v352
        %v355 = vld [vmem:[#allocation10] sm:$0xff]
        %v356 = vld [vmem:[#allocation10 + $0x8] sm:$0xff]
        %v357 = vld [vmem:[#allocation2] sm:$0xff]
        %359 = vrot.lane.b32.xlu0 %v357, 96
        %v360 = vpop.permute.xlu0 %359
        %vm361 = vcmask 64512
        %v363 = vsel %vm361, %v357, 0
        %v366 = vsel %vm361, %v360, 0
        %368 = vmatprep.subr.bf16.mxu0 0
        %369 = vmatpush1.bf16.xpose.msra.mxu0 %v366
        %370 = vmatprep.subr.bf16.mxu0 0
        %371 = vmatpush1.bf16.xpose.msra.mxu0 0
        %372 = vmatprep.subr.bf16.mxu0 0
        %373 = vmatpush1.bf16.xpose.msra.mxu0 0
        %374 = vmatprep.subr.bf16.mxu0 0
        %375 = vmatpush1.bf16.xpose.msra.mxu0 0
        %376 = vmatprep.subr.bf16.mxu0 0
        %377 = vmatpush1.bf16.xpose.msra.mxu0 0
        %378 = vmatprep.subr.bf16.mxu0 0
        %379 = vmatpush1.bf16.xpose.msra.mxu0 0
        %380 = vmatprep.subr.bf16.mxu0 0
        %381 = vmatpush1.bf16.xpose.msra.mxu0 0
        %382 = vmatprep.subr.bf16.mxu0 0
        %383 = vmatpush1.bf16.xpose.msra.mxu0 0
        %384 = vmatprep.subr.bf16.mxu0 0
        %385 = vmatpush1.bf16.xpose.msra.mxu0 0
        %386 = vmatprep.subr.bf16.mxu0 0
        %387 = vmatpush1.bf16.xpose.msra.mxu0 0
        %388 = vmatprep.subr.bf16.mxu0 0
        %389 = vmatpush1.bf16.xpose.msra.mxu0 0
        %390 = vmatprep.subr.bf16.mxu0 0
        %391 = vmatpush1.bf16.xpose.msra.mxu0 0
        %392 = vmatprep.subr.bf16.mxu0 0
        %393 = vmatpush1.bf16.xpose.msra.mxu0 0
        %394 = vmatprep.subr.bf16.mxu0 0
        %395 = vmatpush1.bf16.xpose.msra.mxu0 0
        %396 = vmatprep.subr.bf16.mxu0 0
        %397 = vmatpush1.bf16.xpose.msra.mxu0 0
        %398 = vmatprep.subr.bf16.mxu0 0
        %399 = vmatpush1.bf16.xpose.msra.mxu0 0
        %400 = vmatprep.mubr.bf16.mxu0 0
        %401 = vmatmul.mubr.bf16.gmra.mrb[0].mxu0 %v363
        %v402 = vpop.f32.mrb[0].mxu0
        %v403 = vadd.f32 0.0, %v402
        %v404 = vpop.f32.mrb[0].mxu0
        %v405 = vpop.f32.mrb[0].mxu0
        %v406 = vadd.f32 0.0, %v405
        %v407 = vpop.f32.mrb[0].mxu0
        %408 = vdwg.mxu0
        %v409 = vmul.f32 %v403, 0.35355338
        %v410 = vmul.f32 %v406, 0.35355338
        %v411 = vadd.f32 %v409, %v355
        %v412 = vadd.f32 %v410, %v356
        %vm413 = vcmask 130048
        %v414 = vsel %vm413, %v411, -inf
        %415 = vmax.xlane.f32.xlu0 %v414
        %v416 = vpop.xlane.xlu0 %415
        %v417 = vsel %vm413, %v412, -inf
        %418 = vmax.xlane.f32.xlu0 %v417
        %v419 = vpop.xlane.xlu0 %418
        %v420 = vsub.f32 %v411, %v416
        %v421 = vsub.f32 %v412, %v419
        %v422 = vmul.f32 %v420, 1.442695
        %v423 = vpow.pop %v422
        %v424 = vmul.f32 %v421, 1.442695
        %v425 = vpow.pop %v424
        %v426 = vsel %vm413, %v423, 0.0
        %427 = vadd.xlane.f32.xlu0 %v426
        %v428 = vpop.xlane.xlu0 %427
        %v429 = vsel %vm413, %v425, 0.0
        %430 = vadd.xlane.f32.xlu0 %v429
        %v431 = vpop.xlane.xlu0 %430
        %v432 = vrcp.pop %v428
        %v433 = vrcp.pop %v431
        %v434 = vmul.f32 %v423, %v432
        %v435 = vmul.f32 %v425, %v433
        %v436 = vpack.c.bf16 %v435, %v434
        %437 = vrot.lane.b32.xlu0 %v357, 64
        %v438 = vpop.permute.xlu0 %437
        %v441 = vsel %vm413, %v436, 0
        %443 = vmatprep.subr.bf16.mxu0 0
        %444 = vmatpush1.bf16.msra.mxu0 %v438
        %445 = vmatprep.subr.bf16.mxu0 0
        %446 = vmatpush1.bf16.msra.mxu0 0
        %447 = vmatprep.subr.bf16.mxu0 0
        %448 = vmatpush1.bf16.msra.mxu0 0
        %449 = vmatprep.subr.bf16.mxu0 0
        %450 = vmatpush1.bf16.msra.mxu0 0
        %451 = vmatprep.subr.bf16.mxu0 0
        %452 = vmatpush1.bf16.msra.mxu0 0
        %453 = vmatprep.subr.bf16.mxu0 0
        %454 = vmatpush1.bf16.msra.mxu0 0
        %455 = vmatprep.subr.bf16.mxu0 0
        %456 = vmatpush1.bf16.msra.mxu0 0
        %457 = vmatprep.subr.bf16.mxu0 0
        %458 = vmatpush1.bf16.msra.mxu0 0
        %459 = vmatprep.subr.bf16.mxu0 0
        %460 = vmatpush1.bf16.msra.mxu0 0
        %461 = vmatprep.subr.bf16.mxu0 0
        %462 = vmatpush1.bf16.msra.mxu0 0
        %463 = vmatprep.subr.bf16.mxu0 0
        %464 = vmatpush1.bf16.msra.mxu0 0
        %465 = vmatprep.subr.bf16.mxu0 0
        %466 = vmatpush1.bf16.msra.mxu0 0
        %467 = vmatprep.subr.bf16.mxu0 0
        %468 = vmatpush1.bf16.msra.mxu0 0
        %469 = vmatprep.subr.bf16.mxu0 0
        %470 = vmatpush1.bf16.msra.mxu0 0
        %471 = vmatprep.subr.bf16.mxu0 0
        %472 = vmatpush1.bf16.msra.mxu0 0
        %473 = vmatprep.subr.bf16.mxu0 0
        %474 = vmatpush1.bf16.msra.mxu0 0
        %475 = vmatprep.mubr.bf16.mxu0 0
        %476 = vmatmul.mubr.bf16.gmra.mrb[0].mxu0 %v441
        %v477 = vpop.f32.mrb[0].mxu0
        %v478 = vadd.f32 0.0, %v477
        %v479 = vpop.f32.mrb[0].mxu0
        %v480 = vpop.f32.mrb[0].mxu0
        %v481 = vadd.f32 0.0, %v480
        %v482 = vpop.f32.mrb[0].mxu0
        %483 = vdwg.mxu0
        %v484 = vpack.c.bf16 %v481, %v478
        %485 = vst.msk [vmem:[#allocation3] sm:$0xff] %vm361, %v484
        %v486 = vld [vmem:[#allocation2] sm:$0xff]
        %488 = vrot.lane.b32.xlu0 %v486, 120
        %v489 = vpop.permute.xlu0 %488
        %490 = vrot.lane.b32.xlu0 %v486, 88
        %v491 = vpop.permute.xlu0 %490
        %v493 = vsel %vm361, %v489, 0
        %v496 = vsel %vm361, %v491, 0
        %498 = vmatprep.subr.bf16.mxu0 0
        %499 = vmatpush1.bf16.xpose.msra.mxu0 %v496
        %500 = vmatprep.subr.bf16.mxu0 0
        %501 = vmatpush1.bf16.xpose.msra.mxu0 0
        %502 = vmatprep.subr.bf16.mxu0 0
        %503 = vmatpush1.bf16.xpose.msra.mxu0 0
        %504 = vmatprep.subr.bf16.mxu0 0
        %505 = vmatpush1.bf16.xpose.msra.mxu0 0
        %506 = vmatprep.subr.bf16.mxu0 0
        %507 = vmatpush1.bf16.xpose.msra.mxu0 0
        %508 = vmatprep.subr.bf16.mxu0 0
        %509 = vmatpush1.bf16.xpose.msra.mxu0 0
        %510 = vmatprep.subr.bf16.mxu0 0
        %511 = vmatpush1.bf16.xpose.msra.mxu0 0
        %512 = vmatprep.subr.bf16.mxu0 0
        %513 = vmatpush1.bf16.xpose.msra.mxu0 0
        %514 = vmatprep.subr.bf16.mxu0 0
        %515 = vmatpush1.bf16.xpose.msra.mxu0 0
        %516 = vmatprep.subr.bf16.mxu0 0
        %517 = vmatpush1.bf16.xpose.msra.mxu0 0
        %518 = vmatprep.subr.bf16.mxu0 0
        %519 = vmatpush1.bf16.xpose.msra.mxu0 0
        %520 = vmatprep.subr.bf16.mxu0 0
        %521 = vmatpush1.bf16.xpose.msra.mxu0 0
        %522 = vmatprep.subr.bf16.mxu0 0
        %523 = vmatpush1.bf16.xpose.msra.mxu0 0
        %524 = vmatprep.subr.bf16.mxu0 0
        %525 = vmatpush1.bf16.xpose.msra.mxu0 0
        %526 = vmatprep.subr.bf16.mxu0 0
        %527 = vmatpush1.bf16.xpose.msra.mxu0 0
        %528 = vmatprep.subr.bf16.mxu0 0
        %529 = vmatpush1.bf16.xpose.msra.mxu0 0
        %530 = vmatprep.mubr.bf16.mxu0 0
        %531 = vmatmul.mubr.bf16.gmra.mrb[0].mxu0 %v493
        %v532 = vpop.f32.mrb[0].mxu0
        %v533 = vadd.f32 0.0, %v532
        %v534 = vpop.f32.mrb[0].mxu0
        %v535 = vpop.f32.mrb[0].mxu0
        %v536 = vadd.f32 0.0, %v535
        %v537 = vpop.f32.mrb[0].mxu0
        %538 = vdwg.mxu0
        %v539 = vmul.f32 %v533, 0.35355338
        %v540 = vmul.f32 %v536, 0.35355338
        %v541 = vadd.f32 %v539, %v355
        %v542 = vadd.f32 %v540, %v356
        %v543 = vsel %vm413, %v541, -inf
        %544 = vmax.xlane.f32.xlu0 %v543
        %v545 = vpop.xlane.xlu0 %544
        %v546 = vsel %vm413, %v542, -inf
        %547 = vmax.xlane.f32.xlu0 %v546
        %v548 = vpop.xlane.xlu0 %547
        %v549 = vsub.f32 %v541, %v545
        %v550 = vsub.f32 %v542, %v548
        %v551 = vmul.f32 %v549, 1.442695
        %v552 = vpow.pop %v551
        %v553 = vmul.f32 %v550, 1.442695
        %v554 = vpow.pop %v553
        %v555 = vsel %vm413, %v552, 0.0
        %556 = vadd.xlane.f32.xlu0 %v555
        %v557 = vpop.xlane.xlu0 %556
        %v558 = vsel %vm413, %v554, 0.0
        %559 = vadd.xlane.f32.xlu0 %v558
        %v560 = vpop.xlane.xlu0 %559
        %v561 = vrcp.pop %v557
        %v562 = vrcp.pop %v560
        %v563 = vmul.f32 %v552, %v561
        %v564 = vmul.f32 %v554, %v562
        %v565 = vpack.c.bf16 %v564, %v563
        %566 = vrot.lane.b32.xlu0 %v486, 56
        %v567 = vpop.permute.xlu0 %566
        %v570 = vsel %vm413, %v565, 0
        %572 = vmatprep.subr.bf16.mxu0 0
        %573 = vmatpush1.bf16.msra.mxu0 %v567
        %574 = vmatprep.subr.bf16.mxu0 0
        %575 = vmatpush1.bf16.msra.mxu0 0
        %576 = vmatprep.subr.bf16.mxu0 0
        %577 = vmatpush1.bf16.msra.mxu0 0
        %578 = vmatprep.subr.bf16.mxu0 0
        %579 = vmatpush1.bf16.msra.mxu0 0
        %580 = vmatprep.subr.bf16.mxu0 0
        %581 = vmatpush1.bf16.msra.mxu0 0
        %582 = vmatprep.subr.bf16.mxu0 0
        %583 = vmatpush1.bf16.msra.mxu0 0
        %584 = vmatprep.subr.bf16.mxu0 0
        %585 = vmatpush1.bf16.msra.mxu0 0
        %586 = vmatprep.subr.bf16.mxu0 0
        %587 = vmatpush1.bf16.msra.mxu0 0
        %588 = vmatprep.subr.bf16.mxu0 0
        %589 = vmatpush1.bf16.msra.mxu0 0
        %590 = vmatprep.subr.bf16.mxu0 0
        %591 = vmatpush1.bf16.msra.mxu0 0
        %592 = vmatprep.subr.bf16.mxu0 0
        %593 = vmatpush1.bf16.msra.mxu0 0
        %594 = vmatprep.subr.bf16.mxu0 0
        %595 = vmatpush1.bf16.msra.mxu0 0
        %596 = vmatprep.subr.bf16.mxu0 0
        %597 = vmatpush1.bf16.msra.mxu0 0
        %598 = vmatprep.subr.bf16.mxu0 0
        %599 = vmatpush1.bf16.msra.mxu0 0
        %600 = vmatprep.subr.bf16.mxu0 0
        %601 = vmatpush1.bf16.msra.mxu0 0
        %602 = vmatprep.subr.bf16.mxu0 0
        %603 = vmatpush1.bf16.msra.mxu0 0
        %604 = vmatprep.mubr.bf16.mxu0 0
        %605 = vmatmul.mubr.bf16.gmra.mrb[0].mxu0 %v570
        %v606 = vpop.f32.mrb[0].mxu0
        %v607 = vadd.f32 0.0, %v606
        %v608 = vpop.f32.mrb[0].mxu0
        %v609 = vpop.f32.mrb[0].mxu0
        %v610 = vadd.f32 0.0, %v609
        %v611 = vpop.f32.mrb[0].mxu0
        %612 = vdwg.mxu0
        %v613 = vpack.c.bf16 %v610, %v607
        %615 = vrot.lane.b32.xlu0 %v613, 8
        %v616 = vpop.permute.xlu0 %615
        %vm618 = vcmask 130112
        %619 = vst.msk [vmem:[#allocation3] sm:$0xff] %vm618, %v616
        %v620 = vld [vmem:[#allocation2] sm:$0xff]
        %622 = vrot.lane.b32.xlu0 %v620, 112
        %v623 = vpop.permute.xlu0 %622
        %624 = vrot.lane.b32.xlu0 %v620, 80
        %v625 = vpop.permute.xlu0 %624
        %v627 = vsel %vm361, %v623, 0
        %v630 = vsel %vm361, %v625, 0
        %632 = vmatprep.subr.bf16.mxu0 0
        %633 = vmatpush1.bf16.xpose.msra.mxu0 %v630
        %634 = vmatprep.subr.bf16.mxu0 0
        %635 = vmatpush1.bf16.xpose.msra.mxu0 0
        %636 = vmatprep.subr.bf16.mxu0 0
        %637 = vmatpush1.bf16.xpose.msra.mxu0 0
        %638 = vmatprep.subr.bf16.mxu0 0
        %639 = vmatpush1.bf16.xpose.msra.mxu0 0
        %640 = vmatprep.subr.bf16.mxu0 0
        %641 = vmatpush1.bf16.xpose.msra.mxu0 0
        %642 = vmatprep.subr.bf16.mxu0 0
        %643 = vmatpush1.bf16.xpose.msra.mxu0 0
        %644 = vmatprep.subr.bf16.mxu0 0
        %645 = vmatpush1.bf16.xpose.msra.mxu0 0
        %646 = vmatprep.subr.bf16.mxu0 0
        %647 = vmatpush1.bf16.xpose.msra.mxu0 0
        %648 = vmatprep.subr.bf16.mxu0 0
        %649 = vmatpush1.bf16.xpose.msra.mxu0 0
        %650 = vmatprep.subr.bf16.mxu0 0
        %651 = vmatpush1.bf16.xpose.msra.mxu0 0
        %652 = vmatprep.subr.bf16.mxu0 0
        %653 = vmatpush1.bf16.xpose.msra.mxu0 0
        %654 = vmatprep.subr.bf16.mxu0 0
        %655 = vmatpush1.bf16.xpose.msra.mxu0 0
        %656 = vmatprep.subr.bf16.mxu0 0
        %657 = vmatpush1.bf16.xpose.msra.mxu0 0
        %658 = vmatprep.subr.bf16.mxu0 0
        %659 = vmatpush1.bf16.xpose.msra.mxu0 0
        %660 = vmatprep.subr.bf16.mxu0 0
        %661 = vmatpush1.bf16.xpose.msra.mxu0 0
        %662 = vmatprep.subr.bf16.mxu0 0
        %663 = vmatpush1.bf16.xpose.msra.mxu0 0
        %664 = vmatprep.mubr.bf16.mxu0 0
        %665 = vmatmul.mubr.bf16.gmra.mrb[0].mxu0 %v627
        %v666 = vpop.f32.mrb[0].mxu0
        %v667 = vadd.f32 0.0, %v666
        %v668 = vpop.f32.mrb[0].mxu0
        %v669 = vpop.f32.mrb[0].mxu0
        %v670 = vadd.f32 0.0, %v669
        %v671 = vpop.f32.mrb[0].mxu0
        %672 = vdwg.mxu0
        %v673 = vmul.f32 %v667, 0.35355338
        %v674 = vmul.f32 %v670, 0.35355338
        %v675 = vadd.f32 %v673, %v355
        %v676 = vadd.f32 %v674, %v356
        %v677 = vsel %vm413, %v675, -inf
        %678 = vmax.xlane.f32.xlu0 %v677
        %v679 = vpop.xlane.xlu0 %678
        %v680 = vsel %vm413, %v676, -inf
        %681 = vmax.xlane.f32.xlu0 %v680
        %v682 = vpop.xlane.xlu0 %681
        %v683 = vsub.f32 %v675, %v679
        %v684 = vsub.f32 %v676, %v682
        %v685 = vmul.f32 %v683, 1.442695
        %v686 = vpow.pop %v685
        %v687 = vmul.f32 %v684, 1.442695
        %v688 = vpow.pop %v687
        %v689 = vsel %vm413, %v686, 0.0
        %690 = vadd.xlane.f32.xlu0 %v689
        %v691 = vpop.xlane.xlu0 %690
        %v692 = vsel %vm413, %v688, 0.0
        %693 = vadd.xlane.f32.xlu0 %v692
        %v694 = vpop.xlane.xlu0 %693
        %v695 = vrcp.pop %v691
        %v696 = vrcp.pop %v694
        %v697 = vmul.f32 %v686, %v695
        %v698 = vmul.f32 %v688, %v696
        %v699 = vpack.c.bf16 %v698, %v697
        %700 = vrot.lane.b32.xlu0 %v620, 48
        %v701 = vpop.permute.xlu0 %700
        %v704 = vsel %vm413, %v699, 0
        %706 = vmatprep.subr.bf16.mxu0 0
        %707 = vmatpush1.bf16.msra.mxu0 %v701
        %708 = vmatprep.subr.bf16.mxu0 0
        %709 = vmatpush1.bf16.msra.mxu0 0
        %710 = vmatprep.subr.bf16.mxu0 0
        %711 = vmatpush1.bf16.msra.mxu0 0
        %712 = vmatprep.subr.bf16.mxu0 0
        %713 = vmatpush1.bf16.msra.mxu0 0
        %714 = vmatprep.subr.bf16.mxu0 0
        %715 = vmatpush1.bf16.msra.mxu0 0
        %716 = vmatprep.subr.bf16.mxu0 0
        %717 = vmatpush1.bf16.msra.mxu0 0
        %718 = vmatprep.subr.bf16.mxu0 0
        %719 = vmatpush1.bf16.msra.mxu0 0
        %720 = vmatprep.subr.bf16.mxu0 0
        %721 = vmatpush1.bf16.msra.mxu0 0
        %722 = vmatprep.subr.bf16.mxu0 0
        %723 = vmatpush1.bf16.msra.mxu0 0
        %724 = vmatprep.subr.bf16.mxu0 0
        %725 = vmatpush1.bf16.msra.mxu0 0
        %726 = vmatprep.subr.bf16.mxu0 0
        %727 = vmatpush1.bf16.msra.mxu0 0
        %728 = vmatprep.subr.bf16.mxu0 0
        %729 = vmatpush1.bf16.msra.mxu0 0
        %730 = vmatprep.subr.bf16.mxu0 0
        %731 = vmatpush1.bf16.msra.mxu0 0
        %732 = vmatprep.subr.bf16.mxu0 0
        %733 = vmatpush1.bf16.msra.mxu0 0
        %734 = vmatprep.subr.bf16.mxu0 0
        %735 = vmatpush1.bf16.msra.mxu0 0
        %736 = vmatprep.subr.bf16.mxu0 0
        %737 = vmatpush1.bf16.msra.mxu0 0
        %738 = vmatprep.mubr.bf16.mxu0 0
        %739 = vmatmul.mubr.bf16.gmra.mrb[0].mxu0 %v704
        %v740 = vpop.f32.mrb[0].mxu0
        %v741 = vadd.f32 0.0, %v740
        %v742 = vpop.f32.mrb[0].mxu0
        %v743 = vpop.f32.mrb[0].mxu0
        %v744 = vadd.f32 0.0, %v743
        %v745 = vpop.f32.mrb[0].mxu0
        %746 = vdwg.mxu0
        %v747 = vpack.c.bf16 %v744, %v741
        %749 = vrot.lane.b32.xlu0 %v747, 16
        %v750 = vpop.permute.xlu0 %749
        %vm752 = vcmask 195712
        %753 = vst.msk [vmem:[#allocation3] sm:$0xff] %vm752, %v750
        %v754 = vld [vmem:[#allocation2] sm:$0xff]
        %756 = vrot.lane.b32.xlu0 %v754, 104
        %v757 = vpop.permute.xlu0 %756
        %758 = vrot.lane.b32.xlu0 %v754, 72
        %v759 = vpop.permute.xlu0 %758
        %v761 = vsel %vm361, %v757, 0
        %v764 = vsel %vm361, %v759, 0
        %766 = vmatprep.subr.bf16.mxu0 0
        %767 = vmatpush1.bf16.xpose.msra.mxu0 %v764
        %768 = vmatprep.subr.bf16.mxu0 0
        %769 = vmatpush1.bf16.xpose.msra.mxu0 0
        %770 = vmatprep.subr.bf16.mxu0 0
        %771 = vmatpush1.bf16.xpose.msra.mxu0 0
        %772 = vmatprep.subr.bf16.mxu0 0
        %773 = vmatpush1.bf16.xpose.msra.mxu0 0
        %774 = vmatprep.subr.bf16.mxu0 0
        %775 = vmatpush1.bf16.xpose.msra.mxu0 0
        %776 = vmatprep.subr.bf16.mxu0 0
        %777 = vmatpush1.bf16.xpose.msra.mxu0 0
        %778 = vmatprep.subr.bf16.mxu0 0
        %779 = vmatpush1.bf16.xpose.msra.mxu0 0
        %780 = vmatprep.subr.bf16.mxu0 0
        %781 = vmatpush1.bf16.xpose.msra.mxu0 0
        %782 = vmatprep.subr.bf16.mxu0 0
        %783 = vmatpush1.bf16.xpose.msra.mxu0 0
        %784 = vmatprep.subr.bf16.mxu0 0
        %785 = vmatpush1.bf16.xpose.msra.mxu0 0
        %786 = vmatprep.subr.bf16.mxu0 0
        %787 = vmatpush1.bf16.xpose.msra.mxu0 0
        %788 = vmatprep.subr.bf16.mxu0 0
        %789 = vmatpush1.bf16.xpose.msra.mxu0 0
        %790 = vmatprep.subr.bf16.mxu0 0
        %791 = vmatpush1.bf16.xpose.msra.mxu0 0
        %792 = vmatprep.subr.bf16.mxu0 0
        %793 = vmatpush1.bf16.xpose.msra.mxu0 0
        %794 = vmatprep.subr.bf16.mxu0 0
        %795 = vmatpush1.bf16.xpose.msra.mxu0 0
        %796 = vmatprep.subr.bf16.mxu0 0
        %797 = vmatpush1.bf16.xpose.msra.mxu0 0
        %798 = vmatprep.mubr.bf16.mxu0 0
        %799 = vmatmul.mubr.bf16.gmra.mrb[0].mxu0 %v761
        %v800 = vpop.f32.mrb[0].mxu0
        %v801 = vadd.f32 0.0, %v800
        %v802 = vpop.f32.mrb[0].mxu0
        %v803 = vpop.f32.mrb[0].mxu0
        %v804 = vadd.f32 0.0, %v803
        %v805 = vpop.f32.mrb[0].mxu0
        %806 = vdwg.mxu0
        %v807 = vmul.f32 %v801, 0.35355338
        %v808 = vmul.f32 %v804, 0.35355338
        %v809 = vadd.f32 %v807, %v355
        %v810 = vadd.f32 %v808, %v356
        %v811 = vsel %vm413, %v809, -inf
        %812 = vmax.xlane.f32.xlu0 %v811
        %v813 = vpop.xlane.xlu0 %812
        %v814 = vsel %vm413, %v810, -inf
        %815 = vmax.xlane.f32.xlu0 %v814
        %v816 = vpop.xlane.xlu0 %815
        %v817 = vsub.f32 %v809, %v813
        %v818 = vsub.f32 %v810, %v816
        %v819 = vmul.f32 %v817, 1.442695
        %v820 = vpow.pop %v819
        %v821 = vmul.f32 %v818, 1.442695
        %v822 = vpow.pop %v821
        %v823 = vsel %vm413, %v820, 0.0
        %824 = vadd.xlane.f32.xlu0 %v823
        %v825 = vpop.xlane.xlu0 %824
        %v826 = vsel %vm413, %v822, 0.0
        %827 = vadd.xlane.f32.xlu0 %v826
        %v828 = vpop.xlane.xlu0 %827
        %v829 = vrcp.pop %v825
        %v830 = vrcp.pop %v828
        %v831 = vmul.f32 %v820, %v829
        %v832 = vmul.f32 %v822, %v830
        %v833 = vpack.c.bf16 %v832, %v831
        %834 = vrot.lane.b32.xlu0 %v754, 40
        %v835 = vpop.permute.xlu0 %834
        %v838 = vsel %vm413, %v833, 0
        %840 = vmatprep.subr.bf16.mxu0 0
        %841 = vmatpush1.bf16.msra.mxu0 %v835
        %842 = vmatprep.subr.bf16.mxu0 0
        %843 = vmatpush1.bf16.msra.mxu0 0
        %844 = vmatprep.subr.bf16.mxu0 0
        %845 = vmatpush1.bf16.msra.mxu0 0
        %846 = vmatprep.subr.bf16.mxu0 0
        %847 = vmatpush1.bf16.msra.mxu0 0
        %848 = vmatprep.subr.bf16.mxu0 0
        %849 = vmatpush1.bf16.msra.mxu0 0
        %850 = vmatprep.subr.bf16.mxu0 0
        %851 = vmatpush1.bf16.msra.mxu0 0
        %852 = vmatprep.subr.bf16.mxu0 0
        %853 = vmatpush1.bf16.msra.mxu0 0
        %854 = vmatprep.subr.bf16.mxu0 0
        %855 = vmatpush1.bf16.msra.mxu0 0
        %856 = vmatprep.subr.bf16.mxu0 0
        %857 = vmatpush1.bf16.msra.mxu0 0
        %858 = vmatprep.subr.bf16.mxu0 0
        %859 = vmatpush1.bf16.msra.mxu0 0
        %860 = vmatprep.subr.bf16.mxu0 0
        %861 = vmatpush1.bf16.msra.mxu0 0
        %862 = vmatprep.subr.bf16.mxu0 0
        %863 = vmatpush1.bf16.msra.mxu0 0
        %864 = vmatprep.subr.bf16.mxu0 0
        %865 = vmatpush1.bf16.msra.mxu0 0
        %866 = vmatprep.subr.bf16.mxu0 0
        %867 = vmatpush1.bf16.msra.mxu0 0
        %868 = vmatprep.subr.bf16.mxu0 0
        %869 = vmatpush1.bf16.msra.mxu0 0
        %870 = vmatprep.subr.bf16.mxu0 0
        %871 = vmatpush1.bf16.msra.mxu0 0
        %872 = vmatprep.mubr.bf16.mxu0 0
        %873 = vmatmul.mubr.bf16.gmra.mrb[0].mxu0 %v838
        %v874 = vpop.f32.mrb[0].mxu0
        %v875 = vadd.f32 0.0, %v874
        %v876 = vpop.f32.mrb[0].mxu0
        %v877 = vpop.f32.mrb[0].mxu0
        %v878 = vadd.f32 0.0, %v877
        %v879 = vpop.f32.mrb[0].mxu0
        %880 = vdwg.mxu0
        %v881 = vpack.c.bf16 %v878, %v875
        %883 = vrot.lane.b32.xlu0 %v881, 24
        %v884 = vpop.permute.xlu0 %883
        %vm886 = vcmask 261312
        %887 = vst.msk [vmem:[#allocation3] sm:$0xff] %vm886, %v884
        %v888 = vld [vmem:[#allocation3] sm:$0xff]
        %v889 = vld [vmem:[#allocation9] sm:$0xf]
        %v890 = vld [vmem:[#allocation9 + $0x4] sm:$0xf]
        %v891 = vld [vmem:[#allocation9 + $0x8] sm:$0xf]
        %v892 = vld [vmem:[#allocation9 + $0xc] sm:$0xf]
        %v893 = vld [vmem:[%s3] sm:$0x1]
        %v895 = vlaneseq
        %v896 = vshrl.u32 %v895, 7
        %v897 = vsub.s32 0, %v896
        %v898 = vrot.slane %v893, %v897
        %v904 = vunpack.c.l.b16 %v889
        %v905 = vunpack.c.l.b16 %v890
        %v906 = vunpack.c.l.b16 %v891
        %v907 = vunpack.c.l.b16 %v892
        %v908 = vpack.c.b16 %v905, %v904
        %v909 = vpack.c.b16 %v907, %v906
        %v913 = vsel %vm307, %v888, 0
        %915 = vmatprep.subr.bf16.mxu0 0
        %916 = vmatpush1.bf16.msra.mxu0 %v908
        %917 = vmatprep.subr.bf16.mxu0 0
        %918 = vmatpush1.bf16.msra.mxu0 %v909
        %919 = vmatprep.subr.bf16.mxu0 0
        %920 = vmatpush1.bf16.msra.mxu0 0
        %921 = vmatprep.subr.bf16.mxu0 0
        %922 = vmatpush1.bf16.msra.mxu0 0
        %923 = vmatprep.subr.bf16.mxu0 0
        %924 = vmatpush1.bf16.msra.mxu0 0
        %925 = vmatprep.subr.bf16.mxu0 0
        %926 = vmatpush1.bf16.msra.mxu0 0
        %927 = vmatprep.subr.bf16.mxu0 0
        %928 = vmatpush1.bf16.msra.mxu0 0
        %929 = vmatprep.subr.bf16.mxu0 0
        %930 = vmatpush1.bf16.msra.mxu0 0
        %931 = vmatprep.subr.bf16.mxu0 0
        %932 = vmatpush1.bf16.msra.mxu0 0
        %933 = vmatprep.subr.bf16.mxu0 0
        %934 = vmatpush1.bf16.msra.mxu0 0
        %935 = vmatprep.subr.bf16.mxu0 0
        %936 = vmatpush1.bf16.msra.mxu0 0
        %937 = vmatprep.subr.bf16.mxu0 0
        %938 = vmatpush1.bf16.msra.mxu0 0
        %939 = vmatprep.subr.bf16.mxu0 0
        %940 = vmatpush1.bf16.msra.mxu0 0
        %941 = vmatprep.subr.bf16.mxu0 0
        %942 = vmatpush1.bf16.msra.mxu0 0
        %943 = vmatprep.subr.bf16.mxu0 0
        %944 = vmatpush1.bf16.msra.mxu0 0
        %945 = vmatprep.subr.bf16.mxu0 0
        %946 = vmatpush1.bf16.msra.mxu0 0
        %947 = vmatprep.mubr.bf16.mxu0 0
        %948 = vmatmul.mubr.bf16.gmra.mrb[0].mxu0 %v913
        %v949 = vpop.f32.mrb[0].mxu0
        %v950 = vadd.f32 %v898, %v949
        %v951 = vpop.f32.mrb[0].mxu0
        %v952 = vpop.f32.mrb[0].mxu0
        %v953 = vadd.f32 %v898, %v952
        %v954 = vpop.f32.mrb[0].mxu0
        %955 = vdwg.mxu0
        %956 = vst.msk [vmem:[%s286] sm:$0xff] %vm307, %v950
        %957 = vst.msk [vmem:[%s286 + $0x8] sm:$0xff] %vm307, %v953
        %s958 = sand.u32 %s142, 1
        %s959 = scalar_lea.sflag [#allocation6], %s958
        %s960 = sand.u32 %s142, 1
        %s961 = smul.addr %s960, 16
        %s962 = scalar_lea.vmem [#allocation12], %s961
        // Predicated region
        $region57: #{tpu_custom_call.1} parent=39 // pred_check
          %p963 = pneg %p152
        $region58: #{tpu_custom_call.1} parent=39 // pred_check_branch
          %965 = sbr.rel (%p963) target = $region60
        $region59: #{tpu_custom_call.1} parent=39 // pred_region
          %s967 = ssub.s32 256, 256
          %968 = vsyncadd %s959, %s967
          %s969 = smul.addr %s24, 2
          %s970 = smul.addr %s969, 128
          %s971 = scalar_lea.hbm %s5, %s970
          %s972 = sshll.u32 %s962, 4
          %s973 = int_to_ptr.vmem [resolvable:$true] %s972
          %978 = dma.vmem_to_hbm [thread:$0]  %s973, 256, %s971, %s959, 128, 128, 8
        $region60: #{tpu_custom_call.1} parent=39 // pred_fallthru
          _
      $region40: #{tpu_custom_call.1} parent=5 // pred_fallthru
        _
      %p979 = scmp.le.s32.totalorder 2, %s19
      // Predicated region
      $region61: #{tpu_custom_call.1} parent=5 // pred_check
        %p980 = pneg %p979
      $region62: #{tpu_custom_call.1} parent=5 // pred_check_branch
        %982 = sbr.rel (%p980) target = $region64
      $region63: #{tpu_custom_call.1} parent=5 // pred_region
        %s983 = ssub.s32 %s19, 2
        // Predicated region
        $region65: #{tpu_custom_call.1} parent=63 // pred_check
          %p984 = pneg %p158
        $region66: #{tpu_custom_call.1} parent=63 // pred_check_branch
          %986 = sbr.rel (%p984) target = $region68
        $region67: #{tpu_custom_call.1} parent=63 // pred_region
          %s987 = sand.u32 %s143, 1
          %s988 = scalar_lea.sflag [#allocation6], %s987
          %s989 = sand.u32 %s143, 1
          %s990 = smul.addr %s989, 16
          %s991 = scalar_lea.vmem [#allocation12], %s990
          %992 = dma.done %s988, 256
        $region68: #{tpu_custom_call.1} parent=63 // pred_fallthru
          _
      $region64: #{tpu_custom_call.1} parent=5 // pred_fallthru
        _
    $region6: #{tpu_custom_call.1} parent=1 // loop_footer
      %s23 = sadd.s32 1, %s19
    $region7: #{tpu_custom_call.1} parent=1 // loop_footer_branch
      %18 = sbr.rel target = $region3
    $region8: #{tpu_custom_call.1} parent=1 // loop_exit
      _
    %993 = vsyncpa [#allocation5], 1
    %s994 = scalar_lea.sflag [#allocation5], 1
    %995 = vsyncpa %s994, 1
    %996 = vsyncpa [#allocation8], 1
    %997 = vsyncpa [#allocation11], 1
    %998 = vsyncpa [#allocation6], 1
    %s999 = scalar_lea.sflag [#allocation6], 1
    %1000 = vsyncpa %s999, 1

</llo_original>
